<compile_context>
chip_gen: v7x
topology: tpu7x:2x2x1
jax: 0.10.0
libtpu: 0.0.40
codegen_flags: <defaults>
</compile_context>

<pallas_src>
import functools

import jax
import jax.numpy as jnp
from jax.experimental import pallas as pl
from jax.experimental.pallas import tpu as pltpu


# ----------------------------------------------------------------------------
# Helpers.
# ----------------------------------------------------------------------------
def _round_up(x, m):
    return ((x + m - 1) // m) * m


def _choose_row_tile(m):
    """Row-tile (sublane) size: big enough to hit the HBM roofline on large
    inputs, but no larger than the (8-padded) problem for tiny demos."""
    if m >= 512:
        return 512
    return max(8, _round_up(m, 8))


def _apply_act(y, act):
    if act == "relu":
        return jnp.maximum(y, 0.0)
    if act == "sigmoid":
        return jax.nn.sigmoid(y)
    if act == "identity":
        return y
    raise ValueError(f"unknown activation: {act}")


# ----------------------------------------------------------------------------
# Fused Pallas kernel: all layers of the MLP on one row tile.
#   refs = (x_ref, w0_ref, b0_ref, w1_ref, b1_ref, ..., o_ref)
#   x_ref: (tm, D0p)  w_l: (Dlp, Dl+1p)  b_l: (1, Dl+1p)  o_ref: (tm, DLp)
# The hidden activation stays on-chip (vregs/VMEM) for the whole chain.
# ----------------------------------------------------------------------------
def _fused_mlp_kernel(*refs, acts):
    n_layers = len(acts)
    x_ref = refs[0]
    o_ref = refs[1 + 2 * n_layers]
    h = x_ref[...].astype(jnp.float32)
    for l, act in enumerate(acts):
        w = refs[1 + 2 * l][...]
        b = refs[2 + 2 * l][...]
        h = jnp.dot(h, w, preferred_element_type=jnp.float32) + b
        h = _apply_act(h, act)
    o_ref[...] = h.astype(o_ref.dtype)


def _fused_mlp_call(x2d_p, padded_wb, acts, pdims, tm, out_dtype):
    """x2d_p: (Mp, pdims[0]) already padded; padded_wb: [w0,b0,w1,b1,...]."""
    Mp = x2d_p.shape[0]
    n_layers = len(acts)
    grid = (Mp // tm,)

    in_specs = [pl.BlockSpec((tm, pdims[0]), lambda i: (i, 0))]
    for l in range(n_layers):
        # Constant block index -> weights/biases stay VMEM-resident.
        in_specs.append(
            pl.BlockSpec((pdims[l], pdims[l + 1]), lambda i: (0, 0)))
        in_specs.append(
            pl.BlockSpec((1, pdims[l + 1]), lambda i: (0, 0)))
    out_specs = pl.BlockSpec((tm, pdims[-1]), lambda i: (i, 0))

    # Advisory cost estimate so XLA schedules this well inside larger graphs.
    flops = sum(2 * Mp * pdims[l] * pdims[l + 1] for l in range(n_layers))
    transcendentals = sum(
        Mp * pdims[l + 1] for l in range(n_layers) if acts[l] == "sigmoid")
    bytes_accessed = 4 * (
        x2d_p.size + sum(a.size for a in padded_wb) + Mp * pdims[-1])

    kernel = functools.partial(_fused_mlp_kernel, acts=tuple(acts))
    return pl.pallas_call(
        kernel,
        out_shape=jax.ShapeDtypeStruct((Mp, pdims[-1]), out_dtype),
        grid=grid,
        in_specs=in_specs,
        out_specs=out_specs,
        compiler_params=pltpu.CompilerParams(
            dimension_semantics=("parallel",)),
        cost_estimate=pl.CostEstimate(
            flops=flops,
            transcendentals=transcendentals,
            bytes_accessed=bytes_accessed),
    )(x2d_p, *padded_wb)


# ----------------------------------------------------------------------------
# ExMLP: parameter init + forward.
# ----------------------------------------------------------------------------
def init_exmlp_params(key, layers_dim, dtype=jnp.float32):
    """Matches torch: xavier_normal_ weights (gain=1), zero bias."""
    params = []
    for i in range(len(layers_dim) - 1):
        fan_in, fan_out = layers_dim[i], layers_dim[i + 1]
        key, sub = jax.random.split(key)
        std = (2.0 / (fan_in + fan_out)) ** 0.5
        w = (jax.random.normal(sub, (fan_in, fan_out), dtype=jnp.float32)
             * std).astype(dtype)
        b = jnp.zeros((1, fan_out), dtype=dtype)  # torch bias (1,1,out) ==
        # row-broadcast (1,out); equivalent under broadcasting.
        params.append((w, b))
    return params


def exmlp_forward(x, params, layers_activations):
    """x: (batch, seq, in_features) -> (batch, seq, out_features).

    Pads feature dims to multiples of 128 (lane-dense) and the row axis to a
    multiple of the row tile, runs one fused Pallas kernel, then slices the
    padding back off.
    """
    B, S, F = x.shape
    M = B * S
    dims = [F] + [w.shape[1] for (w, _) in params]
    assert dims[0] == F
    pdims = [_round_up(d, 128) for d in dims]

    tm = _choose_row_tile(M)
    Mp = _round_up(M, tm)

    x2d = x.reshape(M, F)
    x2d_p = jnp.pad(x2d, ((0, Mp - M), (0, pdims[0] - F)))

    padded_wb = []
    for l, (w, b) in enumerate(params):
        wp = jnp.pad(w, ((0, pdims[l] - w.shape[0]),
                         (0, pdims[l + 1] - w.shape[1])))
        bp = jnp.pad(b, ((0, 0), (0, pdims[l + 1] - b.shape[1])))
        padded_wb += [wp, bp]

    out_p = _fused_mlp_call(x2d_p, padded_wb, list(layers_activations),
                            pdims, tm, x.dtype)
    return out_p[:M, :dims[-1]].reshape(B, S, dims[-1])


# ----------------------------------------------------------------------------
# Demo / smoke test.
# ----------------------------------------------------------------------------
if __name__ == "__main__":
    key = jax.random.PRNGKey(0)

    # Small shapes consistent with the module's typical usage in
    # sentiment_start.py: (batch, seq, features) input, 2-layer MLP.
    batch, seq = 2, 8
    layers_dim = [32, 64, 16]
    layers_activations = ["relu", "sigmoid"]

    key, xkey, pkey = jax.random.split(key, 3)
    x = jax.random.normal(xkey, (batch, seq, layers_dim[0]), dtype=jnp.float32)
    params = init_exmlp_params(pkey, layers_dim)

    out = exmlp_forward(x, params, layers_activations)
    out = jax.block_until_ready(out)

    # Pure-JAX reference of the same math.
    act_fns = {"relu": lambda t: jnp.maximum(t, 0.0),
               "sigmoid": jax.nn.sigmoid,
               "identity": lambda t: t}
    h_ref = x
    for (w, b), act in zip(params, layers_activations):
        h_ref = act_fns[act](jnp.matmul(h_ref, w) + b[None])

    assert out.shape == (batch, seq, layers_dim[-1])
    assert jnp.allclose(out, h_ref, atol=2e-5, rtol=2e-5)

    print("KERNEL_OK")
</pallas_src>

<mosaic_0001>
module attributes {stable_mosaic.version = 11 : i64} {
  func.func @_fused_mlp_kernel(%arg0: i32, %arg1: memref<16x128xf32, #tpu.memory_space<vmem>>, %arg2: memref<128x128xf32, #tpu.memory_space<vmem>>, %arg3: memref<1x128xf32, #tpu.memory_space<vmem>>, %arg4: memref<128x128xf32, #tpu.memory_space<vmem>>, %arg5: memref<1x128xf32, #tpu.memory_space<vmem>>, %arg6: memref<16x128xf32, #tpu.memory_space<vmem>>) attributes {dimension_semantics = [#tpu.dimension_semantics<parallel>], iteration_bounds = array<i64: 1>, scalar_prefetch = 0 : i64, scratch_operands = 0 : i64, tpu.core_type = #tpu.core_type<tc>, window_params = [{transform_indices = @transform_0, window_bounds = array<i64: 16, 128>}, {pipeline_mode = #tpu.pipeline_mode<synchronous>, transform_indices = @transform_1, window_bounds = array<i64: 128, 128>}, {pipeline_mode = #tpu.pipeline_mode<synchronous>, transform_indices = @transform_2, window_bounds = array<i64: 1, 128>}, {pipeline_mode = #tpu.pipeline_mode<synchronous>, transform_indices = @transform_3, window_bounds = array<i64: 128, 128>}, {pipeline_mode = #tpu.pipeline_mode<synchronous>, transform_indices = @transform_4, window_bounds = array<i64: 1, 128>}, {transform_indices = @transform_5, window_bounds = array<i64: 16, 128>}]} {
    %c0 = arith.constant 0 : index
    %c0_0 = arith.constant 0 : index
    %0 = vector.load %arg1[%c0, %c0_0] : memref<16x128xf32, #tpu.memory_space<vmem>>, vector<16x128xf32>
    %c0_1 = arith.constant 0 : index
    %c0_2 = arith.constant 0 : index
    %1 = vector.load %arg2[%c0_1, %c0_2] : memref<128x128xf32, #tpu.memory_space<vmem>>, vector<128x128xf32>
    %c0_3 = arith.constant 0 : index
    %c0_4 = arith.constant 0 : index
    %2 = vector.load %arg3[%c0_3, %c0_4] : memref<1x128xf32, #tpu.memory_space<vmem>>, vector<1x128xf32>
    %cst = arith.constant dense<0.000000e+00> : vector<16x128xf32>
    %3 = tpu.matmul %0, %1, %cst {dimension_numbers = #tpu.dot_dimension_numbers<[1], [0], [0], [1], [0, 0, 1, 1], [], []>} : vector<16x128xf32>, vector<128x128xf32>, vector<16x128xf32> -> vector<16x128xf32>
    %4 = vector.broadcast %2 : vector<1x128xf32> to vector<16x128xf32>
    %5 = arith.addf %3, %4 : vector<16x128xf32>
    %cst_5 = arith.constant 0.000000e+00 : f32
    %6 = vector.broadcast %cst_5 : f32 to vector<16x128xf32>
    %7 = arith.maximumf %5, %6 : vector<16x128xf32>
    %c0_6 = arith.constant 0 : index
    %c0_7 = arith.constant 0 : index
    %8 = vector.load %arg4[%c0_6, %c0_7] : memref<128x128xf32, #tpu.memory_space<vmem>>, vector<128x128xf32>
    %c0_8 = arith.constant 0 : index
    %c0_9 = arith.constant 0 : index
    %9 = vector.load %arg5[%c0_8, %c0_9] : memref<1x128xf32, #tpu.memory_space<vmem>>, vector<1x128xf32>
    %cst_10 = arith.constant dense<0.000000e+00> : vector<16x128xf32>
    %10 = tpu.matmul %7, %8, %cst_10 {dimension_numbers = #tpu.dot_dimension_numbers<[1], [0], [0], [1], [0, 0, 1, 1], [], []>} : vector<16x128xf32>, vector<128x128xf32>, vector<16x128xf32> -> vector<16x128xf32>
    %11 = vector.broadcast %9 : vector<1x128xf32> to vector<16x128xf32>
    %12 = arith.addf %10, %11 : vector<16x128xf32>
    %13 = arith.negf %12 : vector<16x128xf32>
    %14 = math.exp %13 : vector<16x128xf32>
    %cst_11 = arith.constant 1.000000e+00 : f32
    %15 = vector.broadcast %cst_11 : f32 to vector<16x128xf32>
    %16 = arith.addf %15, %14 : vector<16x128xf32>
    %17 = arith.divf %15, %16 : vector<16x128xf32>
    %c0_12 = arith.constant 0 : index
    %c0_13 = arith.constant 0 : index
    %18 = vector.load %arg6[%c0_12, %c0_13] : memref<16x128xf32, #tpu.memory_space<vmem>>, vector<16x128xf32>
    tpu.vector_store %arg6[%c0_12, %c0_13], %17 {strides = array<i32>} : memref<16x128xf32, #tpu.memory_space<vmem>>, vector<16x128xf32>,
    return
  }
  func.func @transform_0(%arg0: i32) -> (i32, i32) {
    %c0_i32 = arith.constant 0 : i32
    %c0_i32_0 = arith.constant 0 : i32
    return %arg0, %c0_i32 : i32, i32
  }
  func.func @transform_1(%arg0: i32) -> (i32, i32) {
    %c0_i32 = arith.constant 0 : i32
    %c0_i32_0 = arith.constant 0 : i32
    %c0_i32_1 = arith.constant 0 : i32
    return %c0_i32, %c0_i32_0 : i32, i32
  }
  func.func @transform_2(%arg0: i32) -> (i32, i32) {
    %c0_i32 = arith.constant 0 : i32
    %c0_i32_0 = arith.constant 0 : i32
    %c0_i32_1 = arith.constant 0 : i32
    return %c0_i32, %c0_i32_0 : i32, i32
  }
  func.func @transform_3(%arg0: i32) -> (i32, i32) {
    %c0_i32 = arith.constant 0 : i32
    %c0_i32_0 = arith.constant 0 : i32
    %c0_i32_1 = arith.constant 0 : i32
    return %c0_i32, %c0_i32_0 : i32, i32
  }
  func.func @transform_4(%arg0: i32) -> (i32, i32) {
    %c0_i32 = arith.constant 0 : i32
    %c0_i32_0 = arith.constant 0 : i32
    %c0_i32_1 = arith.constant 0 : i32
    return %c0_i32, %c0_i32_0 : i32, i32
  }
  func.func @transform_5(%arg0: i32) -> (i32, i32) {
    %c0_i32 = arith.constant 0 : i32
    %c0_i32_0 = arith.constant 0 : i32
    return %arg0, %c0_i32 : i32, i32
  }
}

</mosaic_0001>

<llo_original>
// kernel: tpu_custom_call.1
$region0: #{tpu_custom_call.1}
  #allocation0 [shape = 'u32[]', space=smem, size = 0x4, offset = 0x4, fixed_abs, tag = 'smem constant byte address 0x4 - core index']
  #allocation1 [shape = 'u32[144,128]{1,0:T(1,128)}', space=vmem, size = 0x12000, scoped, tag = 'internal scratch']
  %s0 = inlined_call_operand.hbm [shape: f32[16,128], index: 0, kind: input, shape index: {}]
  %s1 = inlined_call_operand.hbm [shape: f32[128,128], index: 1, kind: input, shape index: {}]
  %s2 = inlined_call_operand.vmem [shape: f32[1,128], index: 2, kind: input, shape index: {}]
  %s3 = inlined_call_operand.hbm [shape: f32[128,128], index: 3, kind: input, shape index: {}]
  %s4 = inlined_call_operand.vmem [shape: f32[1,128], index: 4, kind: input, shape index: {}]
  %s5 = inlined_call_operand.hbm [shape: f32[16,128], index: 5, kind: output, shape index: {}]
  %s6 = sld [smem:[#allocation0]]
  $region42: #{tpu_custom_call.1} parent=0
    _
  %s8 = ssub.s32 1, %s6
  %s9 = scalar_select 0, %s8, %s6
  $region1: #{tpu_custom_call.1} parent=0
    #allocation2 [shape = 'u8[8192]{0}', space=vmem, size = 0x2000, scoped, tag = 'input window, operand 0, single buffered']
    #allocation3 [shape = 's32[1]{0}', space=sflag, size = 0x4, scoped, tag = 'scoped memory for tpu_custom_call.1']
    #allocation4 [shape = 's32[1]{0}', space=sflag, size = 0x4, scoped, tag = 'scoped memory for tpu_custom_call.1']
    #allocation5 [shape = 'u8[65536]{0}', space=vmem, size = 0x10000, scoped, tag = 'input window, operand 1, single buffered']
    #allocation6 [shape = 's32[1]{0}', space=sflag, size = 0x4, scoped, tag = 'scoped memory for tpu_custom_call.1']
    #allocation7 [shape = 'u8[65536]{0}', space=vmem, size = 0x10000, scoped, tag = 'input window, operand 3, single buffered']
    #allocation8 [shape = 'u8[8192]{0}', space=vmem, size = 0x2000, scoped, tag = 'output window, operand 0, single buffered']
    %10 = vsyncpa [#allocation3], 0
    %11 = vsyncpa [#allocation6], 0
    %12 = vsyncpa [#allocation4], 0
    // Predicated region
    $region2: #{tpu_custom_call.1} parent=1 // pred_check
      _
    $region3: #{tpu_custom_call.1} parent=1 // pred_check_branch
      %14 = sbr.rel (0) target = $region5
    $region4: #{tpu_custom_call.1} parent=1 // pred_region
      %s16 = ssub.s32 256, 256
      %17 = vsyncadd [#allocation3], %s16
      %s18 = sshll.u32 [#allocation2], 4
      %s19 = int_to_ptr.vmem [resolvable:$true] %s18
      %24 = dma.hbm_to_vmem [thread:$0]  %s0, 256, %s19, [#allocation3], 128, 128, 8
    $region5: #{tpu_custom_call.1} parent=1 // pred_fallthru
      _
    // Predicated region
    $region6: #{tpu_custom_call.1} parent=1 // pred_check
      _
    $region7: #{tpu_custom_call.1} parent=1 // pred_check_branch
      %26 = sbr.rel (0) target = $region9
    $region8: #{tpu_custom_call.1} parent=1 // pred_region
      %s28 = ssub.s32 2048, 2048
      %29 = vsyncadd [#allocation6], %s28
      %s30 = sshll.u32 [#allocation5], 4
      %s31 = int_to_ptr.vmem [resolvable:$true] %s30
      %36 = dma.hbm_to_vmem [thread:$0]  %s1, 2048, %s31, [#allocation6], 128, 128, 8
    $region9: #{tpu_custom_call.1} parent=1 // pred_fallthru
      _
    // Predicated region
    $region10: #{tpu_custom_call.1} parent=1 // pred_check
      _
    $region11: #{tpu_custom_call.1} parent=1 // pred_check_branch
      %38 = sbr.rel (0) target = $region13
    $region12: #{tpu_custom_call.1} parent=1 // pred_region
      _
    $region13: #{tpu_custom_call.1} parent=1 // pred_fallthru
      _
    // Predicated region
    $region14: #{tpu_custom_call.1} parent=1 // pred_check
      _
    $region15: #{tpu_custom_call.1} parent=1 // pred_check_branch
      %40 = sbr.rel (0) target = $region17
    $region16: #{tpu_custom_call.1} parent=1 // pred_region
      %s42 = ssub.s32 2048, 2048
      %43 = vsyncadd [#allocation6], %s42
      %s44 = sshll.u32 [#allocation7], 4
      %s45 = int_to_ptr.vmem [resolvable:$true] %s44
      %50 = dma.hbm_to_vmem [thread:$0]  %s3, 2048, %s45, [#allocation6], 128, 128, 8
    $region17: #{tpu_custom_call.1} parent=1 // pred_fallthru
      _
    // Predicated region
    $region18: #{tpu_custom_call.1} parent=1 // pred_check
      _
    $region19: #{tpu_custom_call.1} parent=1 // pred_check_branch
      %52 = sbr.rel (0) target = $region21
    $region20: #{tpu_custom_call.1} parent=1 // pred_region
      _
    $region21: #{tpu_custom_call.1} parent=1 // pred_fallthru
      _
    // Predicated region
    $region22: #{tpu_custom_call.1} parent=1 // pred_check
      _
    $region23: #{tpu_custom_call.1} parent=1 // pred_check_branch
      %54 = sbr.rel (0) target = $region25
    $region24: #{tpu_custom_call.1} parent=1 // pred_region
      %55 = dma.done [#allocation3], 256
    $region25: #{tpu_custom_call.1} parent=1 // pred_fallthru
      _
    // Predicated region
    $region26: #{tpu_custom_call.1} parent=1 // pred_check
      _
    $region27: #{tpu_custom_call.1} parent=1 // pred_check_branch
      %57 = sbr.rel (0) target = $region29
    $region28: #{tpu_custom_call.1} parent=1 // pred_region
      %58 = dma.done [#allocation6], 2048
    $region29: #{tpu_custom_call.1} parent=1 // pred_fallthru
      _
    // Predicated region
    $region30: #{tpu_custom_call.1} parent=1 // pred_check
      _
    $region31: #{tpu_custom_call.1} parent=1 // pred_check_branch
      %60 = sbr.rel (0) target = $region33
    $region32: #{tpu_custom_call.1} parent=1 // pred_region
      %61 = dma.done [#allocation6], 2048
    $region33: #{tpu_custom_call.1} parent=1 // pred_fallthru
      _
    %v62 = vld [vmem:[#allocation2] sm:$0xff]
    %v63 = vld [vmem:[#allocation2 + $0x8] sm:$0xff]
    %v64 = vld [vmem:[#allocation5] sm:$0xff]
    %v65 = vld [vmem:[#allocation5 + $0x8] sm:$0xff]
    %v66 = vld [vmem:[#allocation5 + $0x10] sm:$0xff]
    %v67 = vld [vmem:[#allocation5 + $0x18] sm:$0xff]
    %v68 = vld [vmem:[#allocation5 + $0x20] sm:$0xff]
    %v69 = vld [vmem:[#allocation5 + $0x28] sm:$0xff]
    %v70 = vld [vmem:[#allocation5 + $0x30] sm:$0xff]
    %v71 = vld [vmem:[#allocation5 + $0x38] sm:$0xff]
    %v72 = vld [vmem:[#allocation5 + $0x40] sm:$0xff]
    %v73 = vld [vmem:[#allocation5 + $0x48] sm:$0xff]
    %v74 = vld [vmem:[#allocation5 + $0x50] sm:$0xff]
    %v75 = vld [vmem:[#allocation5 + $0x58] sm:$0xff]
    %v76 = vld [vmem:[#allocation5 + $0x60] sm:$0xff]
    %v77 = vld [vmem:[#allocation5 + $0x68] sm:$0xff]
    %v78 = vld [vmem:[#allocation5 + $0x70] sm:$0xff]
    %v79 = vld [vmem:[#allocation5 + $0x78] sm:$0xff]
    %v80 = vld [vmem:[%s2] sm:$0x1]
    %v82 = vlaneseq
    %v83 = vshrl.u32 %v82, 7
    %v84 = vsub.s32 0, %v83
    %v85 = vrot.slane %v80, %v84
    %87 = vmatprep.subr.mxu0 0.0
    %88 = vmatpush1.msra.mxu0 %v64
    %89 = vmatprep.subr.mxu0 0.0
    %90 = vmatpush1.msra.mxu0 %v65
    %91 = vmatprep.subr.mxu0 0.0
    %92 = vmatpush1.msra.mxu0 %v66
    %93 = vmatprep.subr.mxu0 0.0
    %94 = vmatpush1.msra.mxu0 %v67
    %95 = vmatprep.subr.mxu0 0.0
    %96 = vmatpush1.msra.mxu0 %v68
    %97 = vmatprep.subr.mxu0 0.0
    %98 = vmatpush1.msra.mxu0 %v69
    %99 = vmatprep.subr.mxu0 0.0
    %100 = vmatpush1.msra.mxu0 %v70
    %101 = vmatprep.subr.mxu0 0.0
    %102 = vmatpush1.msra.mxu0 %v71
    %103 = vmatprep.subr.mxu0 0.0
    %104 = vmatpush1.msra.mxu0 %v72
    %105 = vmatprep.subr.mxu0 0.0
    %106 = vmatpush1.msra.mxu0 %v73
    %107 = vmatprep.subr.mxu0 0.0
    %108 = vmatpush1.msra.mxu0 %v74
    %109 = vmatprep.subr.mxu0 0.0
    %110 = vmatpush1.msra.mxu0 %v75
    %111 = vmatprep.subr.mxu0 0.0
    %112 = vmatpush1.msra.mxu0 %v76
    %113 = vmatprep.subr.mxu0 0.0
    %114 = vmatpush1.msra.mxu0 %v77
    %115 = vmatprep.subr.mxu0 0.0
    %116 = vmatpush1.msra.mxu0 %v78
    %117 = vmatprep.subr.mxu0 0.0
    %118 = vmatpush1.msra.mxu0 %v79
    %119 = vmatprep.subr.mxu0 0.0
    %120 = vmatpush1.msra.mxu0 0.0
    %121 = vmatprep.subr.mxu0 0.0
    %122 = vmatpush1.msra.mxu0 0.0
    %123 = vmatprep.subr.mxu0 0.0
    %124 = vmatpush1.msra.mxu0 0.0
    %125 = vmatprep.subr.mxu0 0.0
    %126 = vmatpush1.msra.mxu0 0.0
    %127 = vmatprep.subr.mxu0 0.0
    %128 = vmatpush1.msra.mxu0 0.0
    %129 = vmatprep.subr.mxu0 0.0
    %130 = vmatpush1.msra.mxu0 0.0
    %131 = vmatprep.subr.mxu0 0.0
    %132 = vmatpush1.msra.mxu0 0.0
    %133 = vmatprep.subr.mxu0 0.0
    %134 = vmatpush1.msra.mxu0 0.0
    %135 = vmatprep.subr.mxu0 0.0
    %136 = vmatpush1.msra.mxu0 0.0
    %137 = vmatprep.subr.mxu0 0.0
    %138 = vmatpush1.msra.mxu0 0.0
    %139 = vmatprep.subr.mxu0 0.0
    %140 = vmatpush1.msra.mxu0 0.0
    %141 = vmatprep.subr.mxu0 0.0
    %142 = vmatpush1.msra.mxu0 0.0
    %143 = vmatprep.subr.mxu0 0.0
    %144 = vmatpush1.msra.mxu0 0.0
    %145 = vmatprep.subr.mxu0 0.0
    %146 = vmatpush1.msra.mxu0 0.0
    %147 = vmatprep.subr.mxu0 0.0
    %148 = vmatpush1.msra.mxu0 0.0
    %149 = vmatprep.subr.mxu0 0.0
    %150 = vmatpush1.msra.mxu0 0.0
    %151 = vmatprep.mubr.f32.mxu0 0.0
    %152 = vmatmul.mubr.f32.gmra.mrb[0].mxu0 %v62
    %v153 = vpop.f32.mrb[0].mxu0
    %v154 = vadd.f32 %v85, %v153
    %v155 = vpop.f32.mrb[0].mxu0
    %156 = vmatprep.mubr.f32.mxu0 0.0
    %157 = vmatmul.mubr.f32.gmra.mrb[0].mxu0 %v63
    %v158 = vpop.f32.mrb[0].mxu0
    %v159 = vadd.f32 %v85, %v158
    %v160 = vpop.f32.mrb[0].mxu0
    %161 = vdwg.mxu0
    %v162 = vmax.f32 %v154, 0.0
    %v163 = vmax.f32 %v159, 0.0
    %v164 = vld [vmem:[#allocation7] sm:$0xff]
    %v165 = vld [vmem:[#allocation7 + $0x8] sm:$0xff]
    %v166 = vld [vmem:[#allocation7 + $0x10] sm:$0xff]
    %v167 = vld [vmem:[#allocation7 + $0x18] sm:$0xff]
    %v168 = vld [vmem:[#allocation7 + $0x20] sm:$0xff]
    %v169 = vld [vmem:[#allocation7 + $0x28] sm:$0xff]
    %v170 = vld [vmem:[#allocation7 + $0x30] sm:$0xff]
    %v171 = vld [vmem:[#allocation7 + $0x38] sm:$0xff]
    %v172 = vld [vmem:[#allocation7 + $0x40] sm:$0xff]
    %v173 = vld [vmem:[#allocation7 + $0x48] sm:$0xff]
    %v174 = vld [vmem:[#allocation7 + $0x50] sm:$0xff]
    %v175 = vld [vmem:[#allocation7 + $0x58] sm:$0xff]
    %v176 = vld [vmem:[#allocation7 + $0x60] sm:$0xff]
    %v177 = vld [vmem:[#allocation7 + $0x68] sm:$0xff]
    %v178 = vld [vmem:[#allocation7 + $0x70] sm:$0xff]
    %v179 = vld [vmem:[#allocation7 + $0x78] sm:$0xff]
    %v180 = vld [vmem:[%s4] sm:$0x1]
    %v182 = vlaneseq
    %v183 = vshrl.u32 %v182, 7
    %v184 = vsub.s32 0, %v183
    %v185 = vrot.slane %v180, %v184
    %187 = vmatprep.subr.mxu0 0.0
    %188 = vmatpush1.msra.mxu0 %v164
    %189 = vmatprep.subr.mxu0 0.0
    %190 = vmatpush1.msra.mxu0 %v165
    %191 = vmatprep.subr.mxu0 0.0
    %192 = vmatpush1.msra.mxu0 %v166
    %193 = vmatprep.subr.mxu0 0.0
    %194 = vmatpush1.msra.mxu0 %v167
    %195 = vmatprep.subr.mxu0 0.0
    %196 = vmatpush1.msra.mxu0 %v168
    %197 = vmatprep.subr.mxu0 0.0
    %198 = vmatpush1.msra.mxu0 %v169
    %199 = vmatprep.subr.mxu0 0.0
    %200 = vmatpush1.msra.mxu0 %v170
    %201 = vmatprep.subr.mxu0 0.0
    %202 = vmatpush1.msra.mxu0 %v171
    %203 = vmatprep.subr.mxu0 0.0
    %204 = vmatpush1.msra.mxu0 %v172
    %205 = vmatprep.subr.mxu0 0.0
    %206 = vmatpush1.msra.mxu0 %v173
    %207 = vmatprep.subr.mxu0 0.0
    %208 = vmatpush1.msra.mxu0 %v174
    %209 = vmatprep.subr.mxu0 0.0
    %210 = vmatpush1.msra.mxu0 %v175
    %211 = vmatprep.subr.mxu0 0.0
    %212 = vmatpush1.msra.mxu0 %v176
    %213 = vmatprep.subr.mxu0 0.0
    %214 = vmatpush1.msra.mxu0 %v177
    %215 = vmatprep.subr.mxu0 0.0
    %216 = vmatpush1.msra.mxu0 %v178
    %217 = vmatprep.subr.mxu0 0.0
    %218 = vmatpush1.msra.mxu0 %v179
    %219 = vmatprep.subr.mxu0 0.0
    %220 = vmatpush1.msra.mxu0 0.0
    %221 = vmatprep.subr.mxu0 0.0
    %222 = vmatpush1.msra.mxu0 0.0
    %223 = vmatprep.subr.mxu0 0.0
    %224 = vmatpush1.msra.mxu0 0.0
    %225 = vmatprep.subr.mxu0 0.0
    %226 = vmatpush1.msra.mxu0 0.0
    %227 = vmatprep.subr.mxu0 0.0
    %228 = vmatpush1.msra.mxu0 0.0
    %229 = vmatprep.subr.mxu0 0.0
    %230 = vmatpush1.msra.mxu0 0.0
    %231 = vmatprep.subr.mxu0 0.0
    %232 = vmatpush1.msra.mxu0 0.0
    %233 = vmatprep.subr.mxu0 0.0
    %234 = vmatpush1.msra.mxu0 0.0
    %235 = vmatprep.subr.mxu0 0.0
    %236 = vmatpush1.msra.mxu0 0.0
    %237 = vmatprep.subr.mxu0 0.0
    %238 = vmatpush1.msra.mxu0 0.0
    %239 = vmatprep.subr.mxu0 0.0
    %240 = vmatpush1.msra.mxu0 0.0
    %241 = vmatprep.subr.mxu0 0.0
    %242 = vmatpush1.msra.mxu0 0.0
    %243 = vmatprep.subr.mxu0 0.0
    %244 = vmatpush1.msra.mxu0 0.0
    %245 = vmatprep.subr.mxu0 0.0
    %246 = vmatpush1.msra.mxu0 0.0
    %247 = vmatprep.subr.mxu0 0.0
    %248 = vmatpush1.msra.mxu0 0.0
    %249 = vmatprep.subr.mxu0 0.0
    %250 = vmatpush1.msra.mxu0 0.0
    %251 = vmatprep.mubr.f32.mxu0 0.0
    %252 = vmatmul.mubr.f32.gmra.mrb[0].mxu0 %v162
    %v253 = vpop.f32.mrb[0].mxu0
    %v254 = vadd.f32 %v185, %v253
    %v255 = vpop.f32.mrb[0].mxu0
    %256 = vmatprep.mubr.f32.mxu0 0.0
    %257 = vmatmul.mubr.f32.gmra.mrb[0].mxu0 %v163
    %v258 = vpop.f32.mrb[0].mxu0
    %v259 = vadd.f32 %v185, %v258
    %v260 = vpop.f32.mrb[0].mxu0
    %261 = vdwg.mxu0
    %v262 = vxor.u32 %v254, 2147483648
    %v263 = vxor.u32 %v259, 2147483648
    %v264 = vmul.f32 %v262, 1.442695
    %v265 = vpow.pop %v264
    %v266 = vmul.f32 %v263, 1.442695
    %v267 = vpow.pop %v266
    %v268 = vadd.f32 %v265, 1.0
    %v269 = vadd.f32 %v267, 1.0
    %v270 = vrcp.pop %v268
    %v271 = vmul.f32 1.0, %v270
    %v272 = vrcp.pop %v269
    %v273 = vmul.f32 1.0, %v272
    %274 = vst [vmem:[#allocation8] sm:$0xff] %v271
    %275 = vst [vmem:[#allocation8 + $0x8] sm:$0xff] %v273
    // Predicated region
    $region34: #{tpu_custom_call.1} parent=1 // pred_check
      _
    $region35: #{tpu_custom_call.1} parent=1 // pred_check_branch
      %277 = sbr.rel (0) target = $region37
    $region36: #{tpu_custom_call.1} parent=1 // pred_region
      %s279 = ssub.s32 256, 256
      %280 = vsyncadd [#allocation4], %s279
      %s281 = sshll.u32 [#allocation8], 4
      %s282 = int_to_ptr.vmem [resolvable:$true] %s281
      %287 = dma.vmem_to_hbm [thread:$0]  %s282, 256, %s5, [#allocation4], 128, 128, 8
    $region37: #{tpu_custom_call.1} parent=1 // pred_fallthru
      _
    // Predicated region
    $region38: #{tpu_custom_call.1} parent=1 // pred_check
      _
    $region39: #{tpu_custom_call.1} parent=1 // pred_check_branch
      %289 = sbr.rel (0) target = $region41
    $region40: #{tpu_custom_call.1} parent=1 // pred_region
      %290 = dma.done [#allocation4], 256
    $region41: #{tpu_custom_call.1} parent=1 // pred_fallthru
      _
    %291 = vsyncpa [#allocation3], 1
    %292 = vsyncpa [#allocation6], 1
    %293 = vsyncpa [#allocation4], 1

</llo_original>
